<compile_context>
chip_gen: v5e
topology: v5e:2x2
jax: 0.10.0
libtpu: 0.0.40
codegen_flags: <defaults>
</compile_context>

<pallas_src>
import math
from functools import partial

import jax
import jax.numpy as jnp
from jax.experimental import pallas as pl
from jax.experimental.pallas import tpu as pltpu


_LANE = 128
_IN_BLOCK_BYTES = 4 * 1024 * 1024       # default combined-input block target (v6e-friendly)
_MIN_BLOCK_BYTES = 512 * 1024           # step-count cap never shrinks input blocks below this
_MIN_IN_BLOCK_BYTES = 64 * 1024         # clamp for caller-provided budgets
_MAX_IN_BLOCK_BYTES = 12 * 1024 * 1024  # keeps 2x(in+out) working set < ~48 MiB (v7x safe)
_MIN_PALLAS_ELEMS = 16 * 1024           # below this, fused XLA slice+max is strictly faster
_TARGET_STEPS = 8                       # >= 4 grid steps per TensorCore on v7x


def _splitmax_combined_kernel(x_ref, o_ref, *, split):
    # x_ref: one contiguous (tr, 2*split) block. split % 128 == 0, so both
    # static slices are lane-tile aligned -> pure VPU max, no VMEM relayout.
    o_ref[...] = jnp.maximum(x_ref[:, :split], x_ref[:, split:])


def _splitmax_halves_kernel(a_ref, b_ref, o_ref):
    # Regime B: a_ref/b_ref are matching (tr, tc) tiles of the two halves.
    o_ref[...] = jnp.maximum(a_ref[...], b_ref[...])


def _round_down(v, m):
    return (v // m) * m


def _vmem_limit(in_block_bytes, out_block_bytes):
    # Double-buffered working set + 25% headroom, clamped for v7x's 64 MiB VMEM.
    working = 2 * (in_block_bytes + out_block_bytes)
    return int(min(max(working * 5 // 4, 8 * 1024 * 1024), 48 * 1024 * 1024))


def _row_tile(rows, row_bytes, in_budget, sub, target_steps):
    """Row tile that (a) fits the input-block budget, (b) is a multiple of the
    sublane granularity (or the full dim), (c) gives >= target_steps grid steps
    for large inputs without shrinking blocks below the efficiency floor."""
    if rows <= sub:
        return rows
    budget_tr = max(sub, _round_down(in_budget // row_bytes, sub))
    cap = max(sub, _round_down(rows // max(target_steps, 1), sub))
    floor_tr = max(sub, _round_down(_MIN_BLOCK_BYTES // row_bytes, sub))
    tr = min(budget_tr, max(cap, floor_tr))
    return min(tr, rows)


def _col_tile(split, half_budget, itemsize, sub):
    """Largest lane tile (multiple of 128, divisor of `split`) such that a
    sub-row half-block fits `half_budget`."""
    n = split // _LANE
    max_lanes = max(1, half_budget // (_LANE * itemsize * sub))
    for cand in range(min(n, max_lanes), 0, -1):
        if n % cand == 0:
            return _LANE * cand
    return _LANE


def split_max(x, split_size, *, block_bytes=_IN_BLOCK_BYTES,
              min_pallas_elems=_MIN_PALLAS_ELEMS):
    """Pallas implementation of SplitMax.forward (2D or 3D inputs)."""
    if x.ndim not in (2, 3):
        raise ValueError("SplitMax expects a 2D or 3D tensor")
    feat = x.shape[-1]
    if feat != 2 * split_size:
        raise ValueError("halves must have equal size (feat == 2*splitSize)")

    lead = x.shape[:-1]
    rows = math.prod(lead)
    itemsize = jnp.dtype(x.dtype).itemsize
    sub = max(8, 32 // itemsize)   # sublane packing granularity (8/16/32)

    if split_size % _LANE != 0 or x.size < min_pallas_elems:
        # Tiny or lane-unaligned: XLA's fused slice+max (no masked partial
        # stores, no kernel-launch cost).
        return jnp.maximum(x[..., :split_size], x[..., split_size:])

    # Clamp the combined-input block budget so the double-buffered working set
    # stays safely under v7x's 64 MiB physical VMEM.
    in_budget = int(min(max(block_bytes, _MIN_IN_BLOCK_BYTES), _MAX_IN_BLOCK_BYTES))

    x2d = x.reshape(rows, feat)
    cost = pl.CostEstimate(
        flops=rows * split_size,
        transcendentals=0,
        bytes_accessed=3 * rows * split_size * itemsize,
    )

    if 2 * split_size * itemsize * sub <= in_budget:
        # ---- Regime A: 1-D row grid, one contiguous (tr, 2S) input block. ----
        row_bytes = 2 * split_size * itemsize
        tr = _row_tile(rows, row_bytes, in_budget, sub, _TARGET_STEPS)
        grid = (pl.cdiv(rows, tr),)
        in_block = tr * row_bytes
        out_block = tr * split_size * itemsize
        out2d = pl.pallas_call(
            partial(_splitmax_combined_kernel, split=split_size),
            out_shape=jax.ShapeDtypeStruct((rows, split_size), x.dtype),
            grid=grid,
            in_specs=[pl.BlockSpec((tr, feat), lambda i: (i, 0))],
            out_specs=pl.BlockSpec((tr, split_size), lambda i: (i, 0)),
            compiler_params=pltpu.CompilerParams(
                dimension_semantics=("parallel",),
                vmem_limit_bytes=_vmem_limit(in_block, out_block),
            ),
            cost_estimate=cost,
        )(x2d)
    else:
        # ---- Regime B: wide-but-short. 2-D grid (row tiles x lane tiles). ----
        tc = _col_tile(split_size, in_budget // 2, itemsize, sub)
        col_steps = split_size // tc
        row_bytes = 2 * tc * itemsize                  # per step: two half blocks
        target_rows = max(1, -(-_TARGET_STEPS // col_steps))
        tr = _row_tile(rows, row_bytes, in_budget, sub, target_rows)
        grid = (pl.cdiv(rows, tr), col_steps)
        nblk = col_steps                               # second half starts at column block nblk
        in_block = 2 * tr * tc * itemsize
        out_block = tr * tc * itemsize
        out2d = pl.pallas_call(
            _splitmax_halves_kernel,
            out_shape=jax.ShapeDtypeStruct((rows, split_size), x.dtype),
            grid=grid,
            in_specs=[
                pl.BlockSpec((tr, tc), lambda i, j: (i, j)),
                pl.BlockSpec((tr, tc), lambda i, j: (i, j + nblk)),
            ],
            out_specs=pl.BlockSpec((tr, tc), lambda i, j: (i, j)),
            compiler_params=pltpu.CompilerParams(
                dimension_semantics=("parallel", "parallel"),
                vmem_limit_bytes=_vmem_limit(in_block, out_block),
            ),
            cost_estimate=cost,
        )(x2d, x2d)

    return out2d.reshape(*lead, split_size)


def _ref(x, s):
    return jnp.maximum(x[..., :s], x[..., s:])


if __name__ == "__main__":
    key = jax.random.PRNGKey(0)
    k1, k2, k3, k4, k5 = jax.random.split(key, 5)

    # 1) 3D, lane-aligned split (S=128) -> Regime A (single combined block).
    s = 128
    x3 = jax.random.normal(k1, (2, 64, 2 * s), dtype=jnp.float32)
    o3 = split_max(x3, s)
    jax.block_until_ready(o3)
    assert o3.shape == (2, 64, s)
    assert jnp.allclose(o3, _ref(x3, s)), "3D Regime-A mismatch"

    # 2) 3D Regime A forced into a multi-step row-tiled grid with a ragged
    #    tail (rows=196, tr=64 -> 4 steps, last one masked).
    x3b = jax.random.normal(k2, (4, 49, 2 * s), dtype=jnp.float32)
    o3b = split_max(x3b, s, block_bytes=64 * 1024, min_pallas_elems=1)
    jax.block_until_ready(o3b)
    assert o3b.shape == (4, 49, s)
    assert jnp.allclose(o3b, _ref(x3b, s)), "tiled/ragged Regime-A mismatch"

    # 3) Wide-but-short input forced into Regime B (2-D grid: 2 row x 2 lane
    #    tiles) via a small block budget.
    s_wide = 2048
    xw = jax.random.normal(k3, (16, 2 * s_wide), dtype=jnp.float32)
    ow = split_max(xw, s_wide, block_bytes=64 * 1024, min_pallas_elems=1)
    jax.block_until_ready(ow)
    assert ow.shape == (16, s_wide)
    assert jnp.allclose(ow, _ref(xw, s_wide)), "Regime-B (column-tiled) mismatch"

    # 4) 2D, tiny input -> fused XLA fallback (kernel launch not worth it).
    x2 = jax.random.normal(k4, (2, 2 * s), dtype=jnp.float32)
    o2 = split_max(x2, s)
    jax.block_until_ready(o2)
    assert o2.shape == (2, s)
    assert jnp.allclose(o2, _ref(x2, s)), "2D fallback mismatch"

    # 5) Non-128-multiple split (original module-sized example) -> fallback.
    s_small = 32
    x_small = jax.random.normal(k5, (2, 8, 2 * s_small), dtype=jnp.float32)
    o_small = split_max(x_small, s_small)
    jax.block_until_ready(o_small)
    assert o_small.shape == (2, 8, s_small)
    assert jnp.allclose(o_small, _ref(x_small, s_small)), "small-S fallback mismatch"

    print("KERNEL_OK")
</pallas_src>

<mosaic_0001>
module attributes {stable_mosaic.version = 11 : i64} {
  func.func @_splitmax_combined_kernel(%arg0: i32, %arg1: memref<128x256xf32, #tpu.memory_space<vmem>>, %arg2: memref<128x128xf32, #tpu.memory_space<vmem>>) attributes {dimension_semantics = [#tpu.dimension_semantics<parallel>], iteration_bounds = array<i64: 1>, scalar_prefetch = 0 : i64, scratch_operands = 0 : i64, tpu.core_type = #tpu.core_type<tc>, window_params = [{transform_indices = @transform_0, window_bounds = array<i64: 128, 256>}, {transform_indices = @transform_1, window_bounds = array<i64: 128, 128>}]} {
    %c0 = arith.constant 0 : index
    %c0_0 = arith.constant 0 : index
    %0 = vector.load %arg1[%c0, %c0_0] : memref<128x256xf32, #tpu.memory_space<vmem>>, vector<128x128xf32>
    %c0_1 = arith.constant 0 : index
    %c128 = arith.constant 128 : index
    %1 = vector.load %arg1[%c0_1, %c128] : memref<128x256xf32, #tpu.memory_space<vmem>>, vector<128x128xf32>
    %2 = arith.maximumf %0, %1 : vector<128x128xf32>
    %c0_2 = arith.constant 0 : index
    %c0_3 = arith.constant 0 : index
    %3 = vector.load %arg2[%c0_2, %c0_3] : memref<128x128xf32, #tpu.memory_space<vmem>>, vector<128x128xf32>
    tpu.vector_store %arg2[%c0_2, %c0_3], %2 {strides = array<i32>} : memref<128x128xf32, #tpu.memory_space<vmem>>, vector<128x128xf32>,
    return
  }
  func.func @transform_0(%arg0: i32) -> (i32, i32) {
    %c0_i32 = arith.constant 0 : i32
    %c0_i32_0 = arith.constant 0 : i32
    return %arg0, %c0_i32 : i32, i32
  }
  func.func @transform_1(%arg0: i32) -> (i32, i32) {
    %c0_i32 = arith.constant 0 : i32
    %c0_i32_0 = arith.constant 0 : i32
    return %arg0, %c0_i32 : i32, i32
  }
}

</mosaic_0001>

<llo_original>
// kernel: tpu_custom_call.1
$region0: #{tpu_custom_call.1}
  #allocation0 [shape = 'u32[]', space=smem, size = 0x4, offset = 0x4, fixed_abs, tag = 'smem constant byte address 0x4 - core index']
  #allocation1 [shape = 'u32[72,128]{1,0:T(1,128)}', space=vmem, size = 0x9000, scoped, tag = 'internal scratch']
  %s0 = inlined_call_operand.hbm [shape: f32[128,256], index: 0, kind: input, shape index: {}]
  %s1 = inlined_call_operand.hbm [shape: f32[128,128], index: 1, kind: output, shape index: {}]
  %s2 = sld [smem:[#allocation0]]
  $region18: #{tpu_custom_call.1} parent=0
    _
  %s4 = ssub.s32 1, %s2
  %s5 = scalar_select 0, %s4, %s2
  $region1: #{tpu_custom_call.1} parent=0
    #allocation2 [shape = 'u8[131072]{0}', space=vmem, size = 0x20000, scoped, tag = 'input window, operand 0, single buffered']
    #allocation3 [shape = 's32[1]{0}', space=sflag, size = 0x4, scoped, tag = 'scoped memory for tpu_custom_call.1']
    #allocation4 [shape = 's32[1]{0}', space=sflag, size = 0x4, scoped, tag = 'scoped memory for tpu_custom_call.1']
    #allocation5 [shape = 'u8[65536]{0}', space=vmem, size = 0x10000, scoped, tag = 'output window, operand 0, single buffered']
    %6 = vsyncpa [#allocation3], 0
    %7 = vsyncpa [#allocation4], 0
    // Predicated region
    $region2: #{tpu_custom_call.1} parent=1 // pred_check
      _
    $region3: #{tpu_custom_call.1} parent=1 // pred_check_branch
      %9 = sbr.rel (0) target = $region5
    $region4: #{tpu_custom_call.1} parent=1 // pred_region
      %11 = vsyncadd [#allocation3], 0
      %s12 = sshll.u32 %s0, 4
      %s13 = int_to_ptr.hbm [resolvable:$true] %s12
      %s14 = sshll.u32 [#allocation2], 4
      %s15 = int_to_ptr.vmem [resolvable:$true] %s14
      %20 = dma.hbm_to_vmem [thread:$0]  %s13, 4096, %s15, [#allocation3], 256, 256, 16
    $region5: #{tpu_custom_call.1} parent=1 // pred_fallthru
      _
    // Predicated region
    $region6: #{tpu_custom_call.1} parent=1 // pred_check
      _
    $region7: #{tpu_custom_call.1} parent=1 // pred_check_branch
      %22 = sbr.rel (0) target = $region9
    $region8: #{tpu_custom_call.1} parent=1 // pred_region
      %24 = dma.done [#allocation3], 4096
    $region9: #{tpu_custom_call.1} parent=1 // pred_fallthru
      _
    %v25 = vld [vmem:[#allocation2] sm:$0xff]
    %v26 = vld [vmem:[#allocation2 + $0x10] sm:$0xff]
    %v27 = vld [vmem:[#allocation2 + $0x20] sm:$0xff]
    %v28 = vld [vmem:[#allocation2 + $0x30] sm:$0xff]
    %v29 = vld [vmem:[#allocation2 + $0x40] sm:$0xff]
    %v30 = vld [vmem:[#allocation2 + $0x50] sm:$0xff]
    %v31 = vld [vmem:[#allocation2 + $0x60] sm:$0xff]
    %v32 = vld [vmem:[#allocation2 + $0x70] sm:$0xff]
    %v33 = vld [vmem:[#allocation2 + $0x80] sm:$0xff]
    %v34 = vld [vmem:[#allocation2 + $0x90] sm:$0xff]
    %v35 = vld [vmem:[#allocation2 + $0xa0] sm:$0xff]
    %v36 = vld [vmem:[#allocation2 + $0xb0] sm:$0xff]
    %v37 = vld [vmem:[#allocation2 + $0xc0] sm:$0xff]
    %v38 = vld [vmem:[#allocation2 + $0xd0] sm:$0xff]
    %v39 = vld [vmem:[#allocation2 + $0xe0] sm:$0xff]
    %v40 = vld [vmem:[#allocation2 + $0xf0] sm:$0xff]
    %v41 = vld [vmem:[#allocation2 + $0x8] sm:$0xff]
    %v42 = vld [vmem:[#allocation2 + $0x18] sm:$0xff]
    %v43 = vld [vmem:[#allocation2 + $0x28] sm:$0xff]
    %v44 = vld [vmem:[#allocation2 + $0x38] sm:$0xff]
    %v45 = vld [vmem:[#allocation2 + $0x48] sm:$0xff]
    %v46 = vld [vmem:[#allocation2 + $0x58] sm:$0xff]
    %v47 = vld [vmem:[#allocation2 + $0x68] sm:$0xff]
    %v48 = vld [vmem:[#allocation2 + $0x78] sm:$0xff]
    %v49 = vld [vmem:[#allocation2 + $0x88] sm:$0xff]
    %v50 = vld [vmem:[#allocation2 + $0x98] sm:$0xff]
    %v51 = vld [vmem:[#allocation2 + $0xa8] sm:$0xff]
    %v52 = vld [vmem:[#allocation2 + $0xb8] sm:$0xff]
    %v53 = vld [vmem:[#allocation2 + $0xc8] sm:$0xff]
    %v54 = vld [vmem:[#allocation2 + $0xd8] sm:$0xff]
    %v55 = vld [vmem:[#allocation2 + $0xe8] sm:$0xff]
    %v56 = vld [vmem:[#allocation2 + $0xf8] sm:$0xff]
    %v57 = vmax.f32 %v25, %v41
    %v58 = vmax.f32 %v26, %v42
    %v59 = vmax.f32 %v27, %v43
    %v60 = vmax.f32 %v28, %v44
    %v61 = vmax.f32 %v29, %v45
    %v62 = vmax.f32 %v30, %v46
    %v63 = vmax.f32 %v31, %v47
    %v64 = vmax.f32 %v32, %v48
    %v65 = vmax.f32 %v33, %v49
    %v66 = vmax.f32 %v34, %v50
    %v67 = vmax.f32 %v35, %v51
    %v68 = vmax.f32 %v36, %v52
    %v69 = vmax.f32 %v37, %v53
    %v70 = vmax.f32 %v38, %v54
    %v71 = vmax.f32 %v39, %v55
    %v72 = vmax.f32 %v40, %v56
    %73 = vst [vmem:[#allocation5] sm:$0xff] %v57
    %74 = vst [vmem:[#allocation5 + $0x8] sm:$0xff] %v58
    %75 = vst [vmem:[#allocation5 + $0x10] sm:$0xff] %v59
    %76 = vst [vmem:[#allocation5 + $0x18] sm:$0xff] %v60
    %77 = vst [vmem:[#allocation5 + $0x20] sm:$0xff] %v61
    %78 = vst [vmem:[#allocation5 + $0x28] sm:$0xff] %v62
    %79 = vst [vmem:[#allocation5 + $0x30] sm:$0xff] %v63
    %80 = vst [vmem:[#allocation5 + $0x38] sm:$0xff] %v64
    %81 = vst [vmem:[#allocation5 + $0x40] sm:$0xff] %v65
    %82 = vst [vmem:[#allocation5 + $0x48] sm:$0xff] %v66
    %83 = vst [vmem:[#allocation5 + $0x50] sm:$0xff] %v67
    %84 = vst [vmem:[#allocation5 + $0x58] sm:$0xff] %v68
    %85 = vst [vmem:[#allocation5 + $0x60] sm:$0xff] %v69
    %86 = vst [vmem:[#allocation5 + $0x68] sm:$0xff] %v70
    %87 = vst [vmem:[#allocation5 + $0x70] sm:$0xff] %v71
    %88 = vst [vmem:[#allocation5 + $0x78] sm:$0xff] %v72
    // Predicated region
    $region10: #{tpu_custom_call.1} parent=1 // pred_check
      _
    $region11: #{tpu_custom_call.1} parent=1 // pred_check_branch
      %90 = sbr.rel (0) target = $region13
    $region12: #{tpu_custom_call.1} parent=1 // pred_region
      %92 = vsyncadd [#allocation4], 0
      %s93 = sshll.u32 [#allocation5], 4
      %s94 = int_to_ptr.vmem [resolvable:$true] %s93
      %s95 = sshll.u32 %s1, 4
      %s96 = int_to_ptr.hbm [resolvable:$true] %s95
      %101 = dma.vmem_to_hbm [thread:$0]  %s94, 2048, %s96, [#allocation4], 128, 128, 8
    $region13: #{tpu_custom_call.1} parent=1 // pred_fallthru
      _
    // Predicated region
    $region14: #{tpu_custom_call.1} parent=1 // pred_check
      _
    $region15: #{tpu_custom_call.1} parent=1 // pred_check_branch
      %103 = sbr.rel (0) target = $region17
    $region16: #{tpu_custom_call.1} parent=1 // pred_region
      %105 = dma.done [#allocation4], 2048
    $region17: #{tpu_custom_call.1} parent=1 // pred_fallthru
      _
    %106 = vsyncpa [#allocation3], 1
    %107 = vsyncpa [#allocation4], 1

</llo_original>
